<compile_context>
chip_gen: v7x
topology: tpu7x:2x2x1
jax: 0.10.0
libtpu: 0.0.40
codegen_flags: <defaults>
</compile_context>

<pallas_src>
import math

import jax
import jax.numpy as jnp
from jax import lax
from jax.experimental import pallas as pl
from jax.experimental.pallas import tpu as pltpu


def _round_up(x, m):
    return ((x + m - 1) // m) * m


# --------------------------- fused fold + gather kernel ---------------------------
def fused_forward_kernel(idx_ref, emb_ref, w1_ref, b1_ref, w2_ref, b2_ref, out_ref):
    """out[r, :] = (relu(emb @ w1 + b1) @ w2 + b2)[idx[r], :] for one block of rows."""
    # ---- fold: per-vocab logits table (ne_pad x c_pad, tiny) ----
    emb = emb_ref[...]                                  # [ne_pad, D] f32
    d = emb.shape[1]
    acc1 = jnp.zeros((emb.shape[0], w1_ref.shape[1]), jnp.float32)
    for k in range(d):                                  # D=4: static unrolled VPU FMA
        acc1 = acc1 + emb[:, k:k + 1] * w1_ref[k:k + 1, :]
    hidden = jnp.maximum(acc1 + b1_ref[...], 0.0)       # [ne_pad, H]
    # H x c_pad matmul on the MXU (c_pad = 128 is a natural MXU shape).
    table = jnp.dot(hidden, w2_ref[...], preferred_element_type=jnp.float32) + b2_ref[...]

    # ---- gather: one-hot @ table on the MXU (lane/sublane dense) ----
    ids = idx_ref[...]                                  # [TM, 1] int32
    tm = ids.shape[0]
    ne_pad = table.shape[0]
    iota = lax.broadcasted_iota(jnp.int32, (tm, ne_pad), 1)
    onehot = (iota == ids).astype(jnp.float32)          # [TM, ne_pad]
    out_ref[...] = jnp.dot(onehot, table, preferred_element_type=jnp.float32)


# --------------------------- wrapper ---------------------------
def prepare_params(emb_table, w1, b1, w2, b2):
    """Hoisted out of the per-forward path: pad params once per weight update."""
    ne, d = emb_table.shape
    h = w1.shape[1]
    c = w2.shape[1]

    c_pad = _round_up(c, 128)                           # lane-dense output/class dim
    ne_pad = _round_up(ne, 8)                           # sublane-aligned vocab dim

    f32 = jnp.float32
    emb_p = jnp.zeros((ne_pad, d), f32).at[:ne].set(emb_table.astype(f32))
    w1_p = w1.astype(f32)
    b1_p = b1.astype(f32).reshape(1, h)
    w2_p = jnp.zeros((h, c_pad), f32).at[:, :c].set(w2.astype(f32))
    b2_p = jnp.zeros((1, c_pad), f32).at[0, :c].set(b2.astype(f32))
    return (emb_p, w1_p, b1_p, w2_p, b2_p, ne, d, h, c, ne_pad, c_pad)


def simple_model_forward(idx, prepared, *, row_block=512):
    emb_p, w1_p, b1_p, w2_p, b2_p, ne, d, h, c, ne_pad, c_pad = prepared
    m = idx.shape[0]

    # Row-block selection: biggest block that fits comfortably, but ensure >= 2
    # grid steps when there is enough work so both v7x TensorCores are used.
    m_pad8 = _round_up(m, 8)
    tm = min(_round_up(row_block, 8), m_pad8)
    if m_pad8 >= 16 and m_pad8 // tm < 2:
        tm = _round_up(m_pad8 // 2, 8)
    m_pad = _round_up(m, tm)

    idx_p = jnp.zeros((m_pad, 1), jnp.int32).at[:m, 0].set(idx.astype(jnp.int32))

    # Right-sized VMEM budget: params + idx/out tiles double-buffered by the
    # pipeline, plus the in-kernel table/hidden intermediates and headroom.
    param_bytes = 4 * (ne_pad * d + d * h + h + h * c_pad + c_pad)
    tile_bytes = 4 * (tm * 1 + tm * c_pad)
    table_bytes = 4 * (ne_pad * c_pad + ne_pad * h)
    vmem_bytes = 2 * param_bytes + 2 * tile_bytes + 2 * table_bytes + (2 << 20)
    vmem_bytes = max(4 << 20, vmem_bytes)

    grid = (m_pad // tm,)
    fold_flops = 2 * ne_pad * (d * h + h * c_pad)
    gather_flops = 2 * tm * ne_pad * c_pad

    out_pad = pl.pallas_call(
        fused_forward_kernel,
        out_shape=jax.ShapeDtypeStruct((m_pad, c_pad), jnp.float32),
        grid_spec=pltpu.PrefetchScalarGridSpec(
            num_scalar_prefetch=0,
            grid=grid,
            in_specs=[
                pl.BlockSpec((tm, 1), lambda i: (i, 0)),        # idx block
                pl.BlockSpec((ne_pad, d), lambda i: (0, 0)),    # emb (constant)
                pl.BlockSpec((d, h), lambda i: (0, 0)),         # w1  (constant)
                pl.BlockSpec((1, h), lambda i: (0, 0)),         # b1  (constant)
                pl.BlockSpec((h, c_pad), lambda i: (0, 0)),     # w2  (constant, padded)
                pl.BlockSpec((1, c_pad), lambda i: (0, 0)),     # b2  (constant, padded)
            ],
            out_specs=pl.BlockSpec((tm, c_pad), lambda i: (i, 0)),
        ),
        compiler_params=pltpu.CompilerParams(
            dimension_semantics=("parallel",),
            vmem_limit_bytes=int(vmem_bytes),
        ),
        cost_estimate=pl.CostEstimate(
            flops=grid[0] * (fold_flops + gather_flops),
            transcendentals=0,
            bytes_accessed=4 * (m_pad + grid[0] * (param_bytes // 4) + m_pad * c_pad),
        ),
    )(idx_p, emb_p, w1_p, b1_p, w2_p, b2_p)

    return out_pad[:m, :c]


# --------------------------- params / reference ---------------------------
def init_params(key, num_embeddings=10, embedding_dim=4, hidden=16, num_classes=10):
    k_emb, k_w1, k_b1, k_w2, k_b2 = jax.random.split(key, 5)
    # nn.Embedding default init: N(0, 1)
    emb = jax.random.normal(k_emb, (num_embeddings, embedding_dim), dtype=jnp.float32)

    # NOTE: TritonLinear stores weight as [in, out]; torch's fan_in calculation on
    # that layout returns size(1) = out_features.  This mirrors the reference
    # module's quirk on purpose — do not "fix" it to in_features.
    def linear_init(kw, kb, in_f, out_f):
        fan_in = out_f
        bound = 1.0 / math.sqrt(fan_in)
        w = jax.random.uniform(kw, (in_f, out_f), jnp.float32, -bound, bound)
        b = jax.random.uniform(kb, (out_f,), jnp.float32, -bound, bound)
        return w, b

    w1, b1 = linear_init(k_w1, k_b1, embedding_dim, hidden)
    w2, b2 = linear_init(k_w2, k_b2, hidden, num_classes)
    return emb, w1, b1, w2, b2


def reference_forward(idx, emb, w1, b1, w2, b2):
    x = emb[idx]                        # [M, D]
    h = jnp.maximum(x @ w1 + b1, 0.0)   # [M, 16]
    return h @ w2 + b2                  # [M, C]


if __name__ == "__main__":
    key = jax.random.PRNGKey(0)
    k_params, k_idx = jax.random.split(key)

    num_embeddings, embedding_dim, hidden, num_classes = 10, 4, 16, 10
    emb, w1, b1, w2, b2 = init_params(k_params, num_embeddings, embedding_dim,
                                      hidden, num_classes)

    M = 8  # batch of token indices
    idx = jax.random.randint(k_idx, (M,), 0, num_embeddings, dtype=jnp.int32)

    prepared = prepare_params(emb, w1, b1, w2, b2)   # once per weight update
    out = simple_model_forward(idx, prepared)
    out = jax.block_until_ready(out)

    ref = reference_forward(idx, emb, w1, b1, w2, b2)
    assert out.shape == (M, num_classes)
    assert jnp.allclose(out, ref, atol=1e-5, rtol=1e-5)

    print("KERNEL_OK")
</pallas_src>

<mosaic_0001>
module attributes {stable_mosaic.version = 11 : i64} {
  func.func @fused_forward_kernel(%arg0: i32, %arg1: memref<8x1xi32, #tpu.memory_space<vmem>>, %arg2: memref<16x4xf32, #tpu.memory_space<vmem>>, %arg3: memref<4x16xf32, #tpu.memory_space<vmem>>, %arg4: memref<1x16xf32, #tpu.memory_space<vmem>>, %arg5: memref<16x128xf32, #tpu.memory_space<vmem>>, %arg6: memref<1x128xf32, #tpu.memory_space<vmem>>, %arg7: memref<8x128xf32, #tpu.memory_space<vmem>>) attributes {dimension_semantics = [#tpu.dimension_semantics<parallel>], iteration_bounds = array<i64: 1>, scalar_prefetch = 0 : i64, scratch_operands = 0 : i64, tpu.core_type = #tpu.core_type<tc>, window_params = [{transform_indices = @transform_0, window_bounds = array<i64: 8, 1>}, {pipeline_mode = #tpu.pipeline_mode<synchronous>, transform_indices = @transform_1, window_bounds = array<i64: 16, 4>}, {pipeline_mode = #tpu.pipeline_mode<synchronous>, transform_indices = @transform_2, window_bounds = array<i64: 4, 16>}, {pipeline_mode = #tpu.pipeline_mode<synchronous>, transform_indices = @transform_3, window_bounds = array<i64: 1, 16>}, {pipeline_mode = #tpu.pipeline_mode<synchronous>, transform_indices = @transform_4, window_bounds = array<i64: 16, 128>}, {pipeline_mode = #tpu.pipeline_mode<synchronous>, transform_indices = @transform_5, window_bounds = array<i64: 1, 128>}, {transform_indices = @transform_6, window_bounds = array<i64: 8, 128>}]} {
    %c0 = arith.constant 0 : index
    %c0_0 = arith.constant 0 : index
    %0 = vector.load %arg2[%c0, %c0_0] : memref<16x4xf32, #tpu.memory_space<vmem>>, vector<16x4xf32>
    %cst = arith.constant 0.000000e+00 : f32
    %1 = vector.broadcast %cst : f32 to vector<16x16xf32>
    %2 = vector.extract_strided_slice %0 {offsets = [0, 0], sizes = [16, 1], strides = [1, 1]} : vector<16x4xf32> to vector<16x1xf32>
    %c0_1 = arith.constant 0 : index
    %c0_2 = arith.constant 0 : index
    %3 = vector.load %arg3[%c0_1, %c0_2] : memref<4x16xf32, #tpu.memory_space<vmem>>, vector<1x16xf32>
    %4 = vector.broadcast %2 : vector<16x1xf32> to vector<16x16xf32>
    %5 = vector.broadcast %3 : vector<1x16xf32> to vector<16x16xf32>
    %6 = arith.mulf %4, %5 : vector<16x16xf32>
    %7 = arith.addf %1, %6 : vector<16x16xf32>
    %8 = vector.extract_strided_slice %0 {offsets = [0, 1], sizes = [16, 1], strides = [1, 1]} : vector<16x4xf32> to vector<16x1xf32>
    %c1 = arith.constant 1 : index
    %c0_3 = arith.constant 0 : index
    %9 = vector.load %arg3[%c1, %c0_3] : memref<4x16xf32, #tpu.memory_space<vmem>>, vector<1x16xf32>
    %10 = vector.broadcast %8 : vector<16x1xf32> to vector<16x16xf32>
    %11 = vector.broadcast %9 : vector<1x16xf32> to vector<16x16xf32>
    %12 = arith.mulf %10, %11 : vector<16x16xf32>
    %13 = arith.addf %7, %12 : vector<16x16xf32>
    %14 = vector.extract_strided_slice %0 {offsets = [0, 2], sizes = [16, 1], strides = [1, 1]} : vector<16x4xf32> to vector<16x1xf32>
    %c2 = arith.constant 2 : index
    %c0_4 = arith.constant 0 : index
    %15 = vector.load %arg3[%c2, %c0_4] : memref<4x16xf32, #tpu.memory_space<vmem>>, vector<1x16xf32>
    %16 = vector.broadcast %14 : vector<16x1xf32> to vector<16x16xf32>
    %17 = vector.broadcast %15 : vector<1x16xf32> to vector<16x16xf32>
    %18 = arith.mulf %16, %17 : vector<16x16xf32>
    %19 = arith.addf %13, %18 : vector<16x16xf32>
    %20 = vector.extract_strided_slice %0 {offsets = [0, 3], sizes = [16, 1], strides = [1, 1]} : vector<16x4xf32> to vector<16x1xf32>
    %c3 = arith.constant 3 : index
    %c0_5 = arith.constant 0 : index
    %21 = vector.load %arg3[%c3, %c0_5] : memref<4x16xf32, #tpu.memory_space<vmem>>, vector<1x16xf32>
    %22 = vector.broadcast %20 : vector<16x1xf32> to vector<16x16xf32>
    %23 = vector.broadcast %21 : vector<1x16xf32> to vector<16x16xf32>
    %24 = arith.mulf %22, %23 : vector<16x16xf32>
    %25 = arith.addf %19, %24 : vector<16x16xf32>
    %c0_6 = arith.constant 0 : index
    %c0_7 = arith.constant 0 : index
    %26 = vector.load %arg4[%c0_6, %c0_7] : memref<1x16xf32, #tpu.memory_space<vmem>>, vector<1x16xf32>
    %27 = vector.broadcast %26 : vector<1x16xf32> to vector<16x16xf32>
    %28 = arith.addf %25, %27 : vector<16x16xf32>
    %cst_8 = arith.constant 0.000000e+00 : f32
    %29 = vector.broadcast %cst_8 : f32 to vector<16x16xf32>
    %30 = arith.maximumf %28, %29 : vector<16x16xf32>
    %c0_9 = arith.constant 0 : index
    %c0_10 = arith.constant 0 : index
    %31 = vector.load %arg5[%c0_9, %c0_10] : memref<16x128xf32, #tpu.memory_space<vmem>>, vector<16x128xf32>
    %cst_11 = arith.constant dense<0.000000e+00> : vector<16x128xf32>
    %32 = tpu.matmul %30, %31, %cst_11 {dimension_numbers = #tpu.dot_dimension_numbers<[1], [0], [0], [1], [0, 0, 1, 1], [], []>} : vector<16x16xf32>, vector<16x128xf32>, vector<16x128xf32> -> vector<16x128xf32>
    %c0_12 = arith.constant 0 : index
    %c0_13 = arith.constant 0 : index
    %33 = vector.load %arg6[%c0_12, %c0_13] : memref<1x128xf32, #tpu.memory_space<vmem>>, vector<1x128xf32>
    %34 = vector.broadcast %33 : vector<1x128xf32> to vector<16x128xf32>
    %35 = arith.addf %32, %34 : vector<16x128xf32>
    %c0_14 = arith.constant 0 : index
    %c0_15 = arith.constant 0 : index
    %36 = vector.load %arg1[%c0_14, %c0_15] : memref<8x1xi32, #tpu.memory_space<vmem>>, vector<8x1xi32>
    %37 = tpu.iota {dimensions = array<i32: 1>} : vector<8x16xi32>
    %38 = vector.broadcast %36 : vector<8x1xi32> to vector<8x16xi32>
    %39 = arith.cmpi eq, %37, %38 : vector<8x16xi32>
    %40 = arith.extui %39 : vector<8x16xi1> to vector<8x16xi32>
    %41 = arith.sitofp %40 : vector<8x16xi32> to vector<8x16xf32>
    %cst_16 = arith.constant dense<0.000000e+00> : vector<8x128xf32>
    %42 = tpu.matmul %41, %35, %cst_16 {dimension_numbers = #tpu.dot_dimension_numbers<[1], [0], [0], [1], [0, 0, 1, 1], [], []>} : vector<8x16xf32>, vector<16x128xf32>, vector<8x128xf32> -> vector<8x128xf32>
    %c0_17 = arith.constant 0 : index
    %c0_18 = arith.constant 0 : index
    %43 = vector.load %arg7[%c0_17, %c0_18] : memref<8x128xf32, #tpu.memory_space<vmem>>, vector<8x128xf32>
    tpu.vector_store %arg7[%c0_17, %c0_18], %42 {strides = array<i32>} : memref<8x128xf32, #tpu.memory_space<vmem>>, vector<8x128xf32>,
    return
  }
  func.func @transform_0(%arg0: i32) -> (i32, i32) {
    %c0_i32 = arith.constant 0 : i32
    %c0_i32_0 = arith.constant 0 : i32
    return %arg0, %c0_i32 : i32, i32
  }
  func.func @transform_1(%arg0: i32) -> (i32, i32) {
    %c0_i32 = arith.constant 0 : i32
    %c0_i32_0 = arith.constant 0 : i32
    %c0_i32_1 = arith.constant 0 : i32
    return %c0_i32, %c0_i32_0 : i32, i32
  }
  func.func @transform_2(%arg0: i32) -> (i32, i32) {
    %c0_i32 = arith.constant 0 : i32
    %c0_i32_0 = arith.constant 0 : i32
    %c0_i32_1 = arith.constant 0 : i32
    return %c0_i32, %c0_i32_0 : i32, i32
  }
  func.func @transform_3(%arg0: i32) -> (i32, i32) {
    %c0_i32 = arith.constant 0 : i32
    %c0_i32_0 = arith.constant 0 : i32
    %c0_i32_1 = arith.constant 0 : i32
    return %c0_i32, %c0_i32_0 : i32, i32
  }
  func.func @transform_4(%arg0: i32) -> (i32, i32) {
    %c0_i32 = arith.constant 0 : i32
    %c0_i32_0 = arith.constant 0 : i32
    %c0_i32_1 = arith.constant 0 : i32
    return %c0_i32, %c0_i32_0 : i32, i32
  }
  func.func @transform_5(%arg0: i32) -> (i32, i32) {
    %c0_i32 = arith.constant 0 : i32
    %c0_i32_0 = arith.constant 0 : i32
    %c0_i32_1 = arith.constant 0 : i32
    return %c0_i32, %c0_i32_0 : i32, i32
  }
  func.func @transform_6(%arg0: i32) -> (i32, i32) {
    %c0_i32 = arith.constant 0 : i32
    %c0_i32_0 = arith.constant 0 : i32
    return %arg0, %c0_i32 : i32, i32
  }
}

</mosaic_0001>

<llo_original>
// kernel: tpu_custom_call.1
$region0: #{tpu_custom_call.1}
  #allocation0 [shape = 'u32[]', space=smem, size = 0x4, offset = 0x4, fixed_abs, tag = 'smem constant byte address 0x4 - core index']
  #allocation1 [shape = 'u32[144,128]{1,0:T(1,128)}', space=vmem, size = 0x12000, scoped, tag = 'internal scratch']
  %s0 = inlined_call_operand.vmem [shape: s32[8,1], index: 0, kind: input, shape index: {}]
  %s1 = inlined_call_operand.vmem [shape: f32[16,4], index: 1, kind: input, shape index: {}]
  %s2 = inlined_call_operand.vmem [shape: f32[4,16], index: 2, kind: input, shape index: {}]
  %s3 = inlined_call_operand.vmem [shape: f32[1,16], index: 3, kind: input, shape index: {}]
  %s4 = inlined_call_operand.vmem [shape: f32[16,128], index: 4, kind: input, shape index: {}]
  %s5 = inlined_call_operand.vmem [shape: f32[1,128], index: 5, kind: input, shape index: {}]
  %s6 = inlined_call_operand.hbm [shape: f32[8,128], index: 6, kind: output, shape index: {}]
  %s7 = sld [smem:[#allocation0]]
  $region34: #{tpu_custom_call.1} parent=0
    _
  %s9 = ssub.s32 1, %s7
  %s10 = scalar_select 0, %s9, %s7
  $region1: #{tpu_custom_call.1} parent=0
    #allocation2 [shape = 'u8[4096]{0}', space=vmem, size = 0x1000, scoped, tag = 'output window, operand 0, single buffered']
    #allocation3 [shape = 's32[1]{0}', space=sflag, size = 0x4, scoped, tag = 'scoped memory for tpu_custom_call.1']
    %11 = vsyncpa [#allocation3], 0
    // Predicated region
    $region2: #{tpu_custom_call.1} parent=1 // pred_check
      _
    $region3: #{tpu_custom_call.1} parent=1 // pred_check_branch
      %13 = sbr.rel (0) target = $region5
    $region4: #{tpu_custom_call.1} parent=1 // pred_region
      _
    $region5: #{tpu_custom_call.1} parent=1 // pred_fallthru
      _
    // Predicated region
    $region6: #{tpu_custom_call.1} parent=1 // pred_check
      _
    $region7: #{tpu_custom_call.1} parent=1 // pred_check_branch
      %15 = sbr.rel (0) target = $region9
    $region8: #{tpu_custom_call.1} parent=1 // pred_region
      _
    $region9: #{tpu_custom_call.1} parent=1 // pred_fallthru
      _
    // Predicated region
    $region10: #{tpu_custom_call.1} parent=1 // pred_check
      _
    $region11: #{tpu_custom_call.1} parent=1 // pred_check_branch
      %17 = sbr.rel (0) target = $region13
    $region12: #{tpu_custom_call.1} parent=1 // pred_region
      _
    $region13: #{tpu_custom_call.1} parent=1 // pred_fallthru
      _
    // Predicated region
    $region14: #{tpu_custom_call.1} parent=1 // pred_check
      _
    $region15: #{tpu_custom_call.1} parent=1 // pred_check_branch
      %19 = sbr.rel (0) target = $region17
    $region16: #{tpu_custom_call.1} parent=1 // pred_region
      _
    $region17: #{tpu_custom_call.1} parent=1 // pred_fallthru
      _
    // Predicated region
    $region18: #{tpu_custom_call.1} parent=1 // pred_check
      _
    $region19: #{tpu_custom_call.1} parent=1 // pred_check_branch
      %21 = sbr.rel (0) target = $region21
    $region20: #{tpu_custom_call.1} parent=1 // pred_region
      _
    $region21: #{tpu_custom_call.1} parent=1 // pred_fallthru
      _
    // Predicated region
    $region22: #{tpu_custom_call.1} parent=1 // pred_check
      _
    $region23: #{tpu_custom_call.1} parent=1 // pred_check_branch
      %23 = sbr.rel (0) target = $region25
    $region24: #{tpu_custom_call.1} parent=1 // pred_region
      _
    $region25: #{tpu_custom_call.1} parent=1 // pred_fallthru
      _
    %v24 = vld [vmem:[%s1] sm:$0xff]
    %v25 = vld [vmem:[%s1 + $0x8] sm:$0xff]
    %v26 = vld [vmem:[%s2] sm:$0x1]
    %28 = vset.pattern.permute.xlu0 0
    %29 = vperm.xlu0 %28, %v24
    %v30 = vpop.permute.xlu0 %29
    %33 = vset.pattern.permute.xlu0 0
    %34 = vperm.xlu0 %33, %v25
    %v35 = vpop.permute.xlu0 %34
    %v37 = vlaneseq
    %v38 = vshrl.u32 %v37, 7
    %v39 = vsub.s32 0, %v38
    %v40 = vrot.slane %v26, %v39
    %v41 = vmul.f32 %v30, %v40
    %v42 = vmul.f32 %v35, %v40
    %v43 = vadd.f32 %v41, 0.0
    %v44 = vadd.f32 %v42, 0.0
    %v45 = vld [vmem:[%s2 + $0x1] sm:$0x1]
    %46 = vset.pattern.permute.xlu0 1
    %47 = vperm.xlu0 %46, %v24
    %v48 = vpop.permute.xlu0 %47
    %50 = vset.pattern.permute.xlu0 1
    %51 = vperm.xlu0 %50, %v25
    %v52 = vpop.permute.xlu0 %51
    %v54 = vlaneseq
    %v55 = vshrl.u32 %v54, 7
    %v56 = vsub.s32 0, %v55
    %v57 = vrot.slane %v45, %v56
    %v58 = vmul.f32 %v48, %v57
    %v59 = vmul.f32 %v52, %v57
    %v60 = vadd.f32 %v43, %v58
    %v61 = vadd.f32 %v44, %v59
    %v62 = vld [vmem:[%s2 + $0x2] sm:$0x1]
    %63 = vset.pattern.permute.xlu0 2
    %64 = vperm.xlu0 %63, %v24
    %v65 = vpop.permute.xlu0 %64
    %67 = vset.pattern.permute.xlu0 2
    %68 = vperm.xlu0 %67, %v25
    %v69 = vpop.permute.xlu0 %68
    %v71 = vlaneseq
    %v72 = vshrl.u32 %v71, 7
    %v73 = vsub.s32 0, %v72
    %v74 = vrot.slane %v62, %v73
    %v75 = vmul.f32 %v65, %v74
    %v76 = vmul.f32 %v69, %v74
    %v77 = vadd.f32 %v60, %v75
    %v78 = vadd.f32 %v61, %v76
    %v79 = vld [vmem:[%s2 + $0x3] sm:$0x1]
    %80 = vset.pattern.permute.xlu0 3
    %81 = vperm.xlu0 %80, %v24
    %v82 = vpop.permute.xlu0 %81
    %84 = vset.pattern.permute.xlu0 3
    %85 = vperm.xlu0 %84, %v25
    %v86 = vpop.permute.xlu0 %85
    %v88 = vlaneseq
    %v89 = vshrl.u32 %v88, 7
    %v90 = vsub.s32 0, %v89
    %v91 = vrot.slane %v79, %v90
    %v92 = vmul.f32 %v82, %v91
    %v93 = vmul.f32 %v86, %v91
    %v94 = vadd.f32 %v77, %v92
    %v95 = vadd.f32 %v78, %v93
    %v96 = vld [vmem:[%s3] sm:$0x1]
    %v98 = vlaneseq
    %v99 = vshrl.u32 %v98, 7
    %v100 = vsub.s32 0, %v99
    %v101 = vrot.slane %v96, %v100
    %v103 = vadd.f32 %v94, %v101
    %v104 = vadd.f32 %v95, %v101
    %v105 = vmax.f32 %v103, 0.0
    %v106 = vmax.f32 %v104, 0.0
    %v107 = vld [vmem:[%s4] sm:$0xff]
    %v108 = vld [vmem:[%s4 + $0x8] sm:$0xff]
    %v109 = vld [vmem:[%s5] sm:$0x1]
    %v111 = vlaneseq
    %v112 = vshrl.u32 %v111, 7
    %v113 = vsub.s32 0, %v112
    %v114 = vrot.slane %v109, %v113
    %vm116 = vcmask 130048
    %v118 = vsel %vm116, %v105, 0
    %v121 = vsel %vm116, %v106, 0
    %123 = vmatprep.subr.mxu0 0.0
    %124 = vmatpush1.msra.mxu0 %v107
    %125 = vmatprep.subr.mxu0 0.0
    %126 = vmatpush1.msra.mxu0 %v108
    %127 = vmatprep.subr.mxu0 0.0
    %128 = vmatpush1.msra.mxu0 0.0
    %129 = vmatprep.subr.mxu0 0.0
    %130 = vmatpush1.msra.mxu0 0.0
    %131 = vmatprep.subr.mxu0 0.0
    %132 = vmatpush1.msra.mxu0 0.0
    %133 = vmatprep.subr.mxu0 0.0
    %134 = vmatpush1.msra.mxu0 0.0
    %135 = vmatprep.subr.mxu0 0.0
    %136 = vmatpush1.msra.mxu0 0.0
    %137 = vmatprep.subr.mxu0 0.0
    %138 = vmatpush1.msra.mxu0 0.0
    %139 = vmatprep.subr.mxu0 0.0
    %140 = vmatpush1.msra.mxu0 0.0
    %141 = vmatprep.subr.mxu0 0.0
    %142 = vmatpush1.msra.mxu0 0.0
    %143 = vmatprep.subr.mxu0 0.0
    %144 = vmatpush1.msra.mxu0 0.0
    %145 = vmatprep.subr.mxu0 0.0
    %146 = vmatpush1.msra.mxu0 0.0
    %147 = vmatprep.subr.mxu0 0.0
    %148 = vmatpush1.msra.mxu0 0.0
    %149 = vmatprep.subr.mxu0 0.0
    %150 = vmatpush1.msra.mxu0 0.0
    %151 = vmatprep.subr.mxu0 0.0
    %152 = vmatpush1.msra.mxu0 0.0
    %153 = vmatprep.subr.mxu0 0.0
    %154 = vmatpush1.msra.mxu0 0.0
    %155 = vmatprep.subr.mxu0 0.0
    %156 = vmatpush1.msra.mxu0 0.0
    %157 = vmatprep.subr.mxu0 0.0
    %158 = vmatpush1.msra.mxu0 0.0
    %159 = vmatprep.subr.mxu0 0.0
    %160 = vmatpush1.msra.mxu0 0.0
    %161 = vmatprep.subr.mxu0 0.0
    %162 = vmatpush1.msra.mxu0 0.0
    %163 = vmatprep.subr.mxu0 0.0
    %164 = vmatpush1.msra.mxu0 0.0
    %165 = vmatprep.subr.mxu0 0.0
    %166 = vmatpush1.msra.mxu0 0.0
    %167 = vmatprep.subr.mxu0 0.0
    %168 = vmatpush1.msra.mxu0 0.0
    %169 = vmatprep.subr.mxu0 0.0
    %170 = vmatpush1.msra.mxu0 0.0
    %171 = vmatprep.subr.mxu0 0.0
    %172 = vmatpush1.msra.mxu0 0.0
    %173 = vmatprep.subr.mxu0 0.0
    %174 = vmatpush1.msra.mxu0 0.0
    %175 = vmatprep.subr.mxu0 0.0
    %176 = vmatpush1.msra.mxu0 0.0
    %177 = vmatprep.subr.mxu0 0.0
    %178 = vmatpush1.msra.mxu0 0.0
    %179 = vmatprep.subr.mxu0 0.0
    %180 = vmatpush1.msra.mxu0 0.0
    %181 = vmatprep.subr.mxu0 0.0
    %182 = vmatpush1.msra.mxu0 0.0
    %183 = vmatprep.subr.mxu0 0.0
    %184 = vmatpush1.msra.mxu0 0.0
    %185 = vmatprep.subr.mxu0 0.0
    %186 = vmatpush1.msra.mxu0 0.0
    %187 = vmatprep.mubr.f32.mxu0 0.0
    %188 = vmatmul.mubr.f32.gmra.mrb[0].mxu0 %v118
    %v189 = vpop.f32.mrb[0].mxu0
    %v190 = vadd.f32 %v114, %v189
    %v191 = vpop.f32.mrb[0].mxu0
    %192 = vmatprep.mubr.f32.mxu0 0.0
    %193 = vmatmul.mubr.f32.gmra.mrb[0].mxu0 %v121
    %v194 = vpop.f32.mrb[0].mxu0
    %v195 = vadd.f32 %v114, %v194
    %v196 = vpop.f32.mrb[0].mxu0
    %197 = vdwg.mxu0
    %v198 = vld [vmem:[%s0] sm:$0xff]
    %v199 = vlaneseq
    %v200 = vand.u32 %v199, 127
    %201 = vset.pattern.permute.xlu0 0
    %202 = vperm.xlu0 %201, %v198
    %v203 = vpop.permute.xlu0 %202
    %vm204 = vcmp.eq.s32.totalorder %v200, %v203
    %v205 = vsel %vm204, 1, 0
    %v206 = vcvt.s32.f32 %v205
    %v208 = vsel %vm116, %v206, 0
    %210 = vmatprep.subr.mxu0 0.0
    %211 = vmatpush1.msra.mxu0 %v190
    %212 = vmatprep.subr.mxu0 0.0
    %213 = vmatpush1.msra.mxu0 %v195
    %214 = vmatprep.subr.mxu0 0.0
    %215 = vmatpush1.msra.mxu0 0.0
    %216 = vmatprep.subr.mxu0 0.0
    %217 = vmatpush1.msra.mxu0 0.0
    %218 = vmatprep.subr.mxu0 0.0
    %219 = vmatpush1.msra.mxu0 0.0
    %220 = vmatprep.subr.mxu0 0.0
    %221 = vmatpush1.msra.mxu0 0.0
    %222 = vmatprep.subr.mxu0 0.0
    %223 = vmatpush1.msra.mxu0 0.0
    %224 = vmatprep.subr.mxu0 0.0
    %225 = vmatpush1.msra.mxu0 0.0
    %226 = vmatprep.subr.mxu0 0.0
    %227 = vmatpush1.msra.mxu0 0.0
    %228 = vmatprep.subr.mxu0 0.0
    %229 = vmatpush1.msra.mxu0 0.0
    %230 = vmatprep.subr.mxu0 0.0
    %231 = vmatpush1.msra.mxu0 0.0
    %232 = vmatprep.subr.mxu0 0.0
    %233 = vmatpush1.msra.mxu0 0.0
    %234 = vmatprep.subr.mxu0 0.0
    %235 = vmatpush1.msra.mxu0 0.0
    %236 = vmatprep.subr.mxu0 0.0
    %237 = vmatpush1.msra.mxu0 0.0
    %238 = vmatprep.subr.mxu0 0.0
    %239 = vmatpush1.msra.mxu0 0.0
    %240 = vmatprep.subr.mxu0 0.0
    %241 = vmatpush1.msra.mxu0 0.0
    %242 = vmatprep.subr.mxu0 0.0
    %243 = vmatpush1.msra.mxu0 0.0
    %244 = vmatprep.subr.mxu0 0.0
    %245 = vmatpush1.msra.mxu0 0.0
    %246 = vmatprep.subr.mxu0 0.0
    %247 = vmatpush1.msra.mxu0 0.0
    %248 = vmatprep.subr.mxu0 0.0
    %249 = vmatpush1.msra.mxu0 0.0
    %250 = vmatprep.subr.mxu0 0.0
    %251 = vmatpush1.msra.mxu0 0.0
    %252 = vmatprep.subr.mxu0 0.0
    %253 = vmatpush1.msra.mxu0 0.0
    %254 = vmatprep.subr.mxu0 0.0
    %255 = vmatpush1.msra.mxu0 0.0
    %256 = vmatprep.subr.mxu0 0.0
    %257 = vmatpush1.msra.mxu0 0.0
    %258 = vmatprep.subr.mxu0 0.0
    %259 = vmatpush1.msra.mxu0 0.0
    %260 = vmatprep.subr.mxu0 0.0
    %261 = vmatpush1.msra.mxu0 0.0
    %262 = vmatprep.subr.mxu0 0.0
    %263 = vmatpush1.msra.mxu0 0.0
    %264 = vmatprep.subr.mxu0 0.0
    %265 = vmatpush1.msra.mxu0 0.0
    %266 = vmatprep.subr.mxu0 0.0
    %267 = vmatpush1.msra.mxu0 0.0
    %268 = vmatprep.subr.mxu0 0.0
    %269 = vmatpush1.msra.mxu0 0.0
    %270 = vmatprep.subr.mxu0 0.0
    %271 = vmatpush1.msra.mxu0 0.0
    %272 = vmatprep.subr.mxu0 0.0
    %273 = vmatpush1.msra.mxu0 0.0
    %274 = vmatprep.mubr.f32.mxu0 0.0
    %275 = vmatmul.mubr.f32.gmra.mrb[0].mxu0 %v208
    %v276 = vpop.f32.mrb[0].mxu0
    %v277 = vadd.f32 0.0, %v276
    %v278 = vpop.f32.mrb[0].mxu0
    %279 = vdwg.mxu0
    %280 = vst [vmem:[#allocation2] sm:$0xff] %v277
    // Predicated region
    $region26: #{tpu_custom_call.1} parent=1 // pred_check
      _
    $region27: #{tpu_custom_call.1} parent=1 // pred_check_branch
      %282 = sbr.rel (0) target = $region29
    $region28: #{tpu_custom_call.1} parent=1 // pred_region
      %s284 = ssub.s32 128, 128
      %285 = vsyncadd [#allocation3], %s284
      %s287 = sshll.u32 [#allocation2], 4
      %s288 = int_to_ptr.vmem [resolvable:$true] %s287
      %290 = dma.vmem_to_hbm [thread:$0]  %s288, 128, %s6, [#allocation3]
    $region29: #{tpu_custom_call.1} parent=1 // pred_fallthru
      _
    // Predicated region
    $region30: #{tpu_custom_call.1} parent=1 // pred_check
      _
    $region31: #{tpu_custom_call.1} parent=1 // pred_check_branch
      %292 = sbr.rel (0) target = $region33
    $region32: #{tpu_custom_call.1} parent=1 // pred_region
      %293 = dma.done [#allocation3], 128
    $region33: #{tpu_custom_call.1} parent=1 // pred_fallthru
      _
    %294 = vsyncpa [#allocation3], 1

</llo_original>
